<compile_context>
chip_gen: v6e
topology: v6e:2x2x1
jax: 0.10.0
libtpu: 0.0.40
codegen_flags: <defaults>
</compile_context>

<pallas_src>
import functools

import jax
import jax.numpy as jnp
from jax import lax
from jax.experimental import pallas as pl
from jax.experimental.pallas import tpu as pltpu


def _round_up(x, m):
    return (x + m - 1) // m * m


def critic_mlp_kernel(obs_ref, act_ref, w1o_ref, w1a_ref, w2_ref, pk_ref, b3_ref,
                      out_ref, *, matmul_dtype):
    H0, H1 = w2_ref.shape

    # Packed small params: one lane-width row [b1 (H0) | b2 (H1) | w3 (H1) | pad].
    b1 = pk_ref[:, 0:H0]                        # (1, H0)
    b2 = pk_ref[:, H0:H0 + H1]                  # (1, H1)
    w3 = pk_ref[:, H0 + H1:H0 + 2 * H1]         # (1, H1)

    # Layer 1: fused concat == obs @ w1_obs + action @ w1_act, f32 accumulation.
    # The MXU-input cast is a no-op unless the wrapper selected bf16 (large-B only).
    h1 = (jnp.dot(obs_ref[...].astype(matmul_dtype), w1o_ref[...].astype(matmul_dtype),
                  preferred_element_type=jnp.float32)
          + jnp.dot(act_ref[...].astype(matmul_dtype), w1a_ref[...].astype(matmul_dtype),
                    preferred_element_type=jnp.float32)
          + b1)
    h1 = jnp.maximum(h1, 0.0)                   # (TB, H0), f32 VPU

    # Layer 2
    h2 = jnp.dot(h1.astype(matmul_dtype), w2_ref[...].astype(matmul_dtype),
                 preferred_element_type=jnp.float32) + b2
    h2 = jnp.maximum(h2, 0.0)                   # (TB, H1), f32 VPU

    # Layer 3 (out_features == 1): contract H1 as (1, H1) . (TB, H1)^T -> (1, TB), so the
    # result is already lane-dense (no (TB, 1) column, no masked partial stores).
    q = lax.dot_general(w3, h2, (((1,), (1,)), ((), ())),
                        preferred_element_type=jnp.float32)
    q = q + b3_ref[0]                           # scalar bias from SMEM
    out_ref[...] = q.astype(out_ref.dtype)      # (1, TB) lane-dense row store


@jax.jit
def critic_forward(obs, action, params):
    """obs: (B, obs_dim), action: (B, action_dim) -> (B,)"""
    w1, b1, w2, b2, w3, b3 = params
    obs = obs.astype(jnp.float32)
    action = action.astype(jnp.float32)

    B, obs_dim = obs.shape
    act_dim = action.shape[1]
    H0 = w1.shape[1]
    H1 = w2.shape[1]

    # ---- batch tile / padding (explicit: no ragged tail block) ----------------------
    MAX_TB = 1024
    if B <= MAX_TB:
        TB = _round_up(B, 8)                    # single grid step
    else:
        # >= 2 grid steps so v7x's two TensorCores both get work; multiple of 128 keeps
        # the lane-dense output block aligned.
        TB = min(MAX_TB, _round_up(pl.cdiv(B, 2), 128))
    B_pad = _round_up(B, TB)
    nb = B_pad // TB
    if B_pad != B:
        obs = jnp.pad(obs, ((0, B_pad - B), (0, 0)))
        action = jnp.pad(action, ((0, B_pad - B), (0, 0)))

    # ---- parameter prep --------------------------------------------------------------
    w1o = w1[:obs_dim].astype(jnp.float32)      # (obs_dim, H0): fused-concat split
    w1a = w1[obs_dim:].astype(jnp.float32)      # (act_dim, H0)
    P = _round_up(H0 + 2 * H1, 128)             # one lane-width row [b1 | b2 | w3 | pad]
    packed = jnp.concatenate([
        b1.reshape(-1).astype(jnp.float32),
        b2.reshape(-1).astype(jnp.float32),
        w3.reshape(-1).astype(jnp.float32),
        jnp.zeros((P - (H0 + 2 * H1),), jnp.float32),
    ]).reshape(1, P)
    b3_s = b3.reshape(1).astype(jnp.float32)    # scalar bias -> SMEM

    # bf16 MXU inputs only once the kernel can actually be compute-bound (large B);
    # elementwise path stays f32 everywhere (v5e-safe).
    matmul_dtype = jnp.bfloat16 if B_pad >= 4096 else jnp.float32

    flops = 2 * B_pad * (obs_dim * H0 + act_dim * H0 + H0 * H1 + H1)
    bytes_accessed = 4 * (B_pad * (obs_dim + act_dim + 1)
                          + (obs_dim + act_dim) * H0 + H0 * H1 + P + 1)

    out = pl.pallas_call(
        functools.partial(critic_mlp_kernel, matmul_dtype=matmul_dtype),
        out_shape=jax.ShapeDtypeStruct((nb, 1, TB), jnp.float32),
        grid=(nb,),
        in_specs=[
            pl.BlockSpec((TB, obs_dim), lambda i: (i, 0)),      # obs    (batch-blocked)
            pl.BlockSpec((TB, act_dim), lambda i: (i, 0)),      # action (batch-blocked)
            pl.BlockSpec((obs_dim, H0), lambda i: (0, 0)),      # w1_obs (resident)
            pl.BlockSpec((act_dim, H0), lambda i: (0, 0)),      # w1_act (resident)
            pl.BlockSpec((H0, H1), lambda i: (0, 0)),           # w2     (resident)
            pl.BlockSpec((1, P), lambda i: (0, 0)),             # [b1|b2|w3] row (resident)
            pl.BlockSpec(memory_space=pltpu.MemorySpace.SMEM),  # b3 scalar in SMEM
        ],
        out_specs=pl.BlockSpec((None, 1, TB), lambda i: (i, 0, 0)),  # lane-dense row
        compiler_params=pltpu.CompilerParams(
            dimension_semantics=("parallel",)),
        cost_estimate=pl.CostEstimate(
            flops=flops, transcendentals=0, bytes_accessed=bytes_accessed),
    )(obs, action, w1o, w1a, w2, packed, b3_s)

    # (nb, 1, TB) is contiguous over the padded batch; reshape is free, slice drops pad.
    return out.reshape(-1)[:B]


def init_params(key, obs_dim, action_dim, hidden_state=(64, 32)):
    """Deterministic synthetic init (uniform, PyTorch-Linear-like fan-in scaling).
    Weights stored as [in_features, out_features] (transposed vs. nn.Linear.weight)."""
    in_dim = obs_dim + action_dim
    dims = [in_dim, hidden_state[0], hidden_state[1], 1]
    params = []
    for i in range(3):
        key, kw, kb = jax.random.split(key, 3)
        bound = 1.0 / jnp.sqrt(dims[i])
        w = jax.random.uniform(kw, (dims[i], dims[i + 1]), jnp.float32, -bound, bound)
        b = jax.random.uniform(kb, (1, dims[i + 1]), jnp.float32, -bound, bound)
        params += [w, b]
    return tuple(params)


if __name__ == "__main__":
    obs_dim, action_dim = 12, 4

    key = jax.random.PRNGKey(0)
    kp, kd = jax.random.split(key)
    params = init_params(kp, obs_dim, action_dim, hidden_state=(64, 32))

    def reference(obs, action, params):
        # Mirrors the PyTorch module: concat -> 3x Linear (+ReLU) -> squeeze(-1).
        w1, b1, w2, b2, w3, b3 = params
        x = jnp.concatenate([obs, action], axis=-1)
        h = jnp.maximum(x @ w1 + b1, 0.0)
        h = jnp.maximum(h @ w2 + b2, 0.0)
        return (h @ w3 + b3)[:, 0]

    for batch in (8, 10):   # 10 exercises the pad-to-tile path
        ko, ka = jax.random.split(jax.random.fold_in(kd, batch))
        obs = jax.random.normal(ko, (batch, obs_dim), jnp.float32)
        action = jax.random.normal(ka, (batch, action_dim), jnp.float32)

        q = jax.block_until_ready(critic_forward(obs, action, params))
        ref = reference(obs, action, params)

        assert q.shape == (batch,), q.shape
        assert jnp.allclose(q, ref, atol=1e-4), (q, ref)

    print("KERNEL_OK")
</pallas_src>

<mosaic_0001>
module attributes {stable_mosaic.version = 11 : i64} {
  func.func @critic_mlp_kernel(%arg0: i32, %arg1: memref<8x12xf32, #tpu.memory_space<vmem>>, %arg2: memref<8x4xf32, #tpu.memory_space<vmem>>, %arg3: memref<12x64xf32, #tpu.memory_space<vmem>>, %arg4: memref<4x64xf32, #tpu.memory_space<vmem>>, %arg5: memref<64x32xf32, #tpu.memory_space<vmem>>, %arg6: memref<1x128xf32, #tpu.memory_space<vmem>>, %arg7: memref<1xf32, #tpu.memory_space<smem>>, %arg8: memref<1x1x8xf32, #tpu.memory_space<vmem>>) attributes {dimension_semantics = [#tpu.dimension_semantics<parallel>], iteration_bounds = array<i64: 1>, scalar_prefetch = 0 : i64, scratch_operands = 0 : i64, tpu.core_type = #tpu.core_type<tc>, window_params = [{transform_indices = @transform_0, window_bounds = array<i64: 8, 12>}, {transform_indices = @transform_1, window_bounds = array<i64: 8, 4>}, {pipeline_mode = #tpu.pipeline_mode<synchronous>, transform_indices = @transform_2, window_bounds = array<i64: 12, 64>}, {pipeline_mode = #tpu.pipeline_mode<synchronous>, transform_indices = @transform_3, window_bounds = array<i64: 4, 64>}, {pipeline_mode = #tpu.pipeline_mode<synchronous>, transform_indices = @transform_4, window_bounds = array<i64: 64, 32>}, {pipeline_mode = #tpu.pipeline_mode<synchronous>, transform_indices = @transform_5, window_bounds = array<i64: 1, 128>}, {transform_indices = @transform_6, window_bounds = array<i64: 1>}, {transform_indices = @transform_7, window_bounds = array<i64: 1, 1, 8>}]} {
    %c0 = arith.constant 0 : index
    %c0_0 = arith.constant 0 : index
    %0 = vector.load %arg6[%c0, %c0_0] : memref<1x128xf32, #tpu.memory_space<vmem>>, vector<1x64xf32>
    %c0_1 = arith.constant 0 : index
    %c64 = arith.constant 64 : index
    %1 = vector.load %arg6[%c0_1, %c64] : memref<1x128xf32, #tpu.memory_space<vmem>>, vector<1x32xf32>
    %c0_2 = arith.constant 0 : index
    %c96 = arith.constant 96 : index
    %2 = vector.load %arg6[%c0_2, %c96] : memref<1x128xf32, #tpu.memory_space<vmem>>, vector<1x32xf32>
    %c0_3 = arith.constant 0 : index
    %c0_4 = arith.constant 0 : index
    %3 = vector.load %arg1[%c0_3, %c0_4] : memref<8x12xf32, #tpu.memory_space<vmem>>, vector<8x12xf32>
    %c0_5 = arith.constant 0 : index
    %c0_6 = arith.constant 0 : index
    %4 = vector.load %arg3[%c0_5, %c0_6] : memref<12x64xf32, #tpu.memory_space<vmem>>, vector<12x64xf32>
    %cst = arith.constant dense<0.000000e+00> : vector<8x64xf32>
    %5 = tpu.matmul %3, %4, %cst {dimension_numbers = #tpu.dot_dimension_numbers<[1], [0], [0], [1], [0, 0, 1, 1], [], []>} : vector<8x12xf32>, vector<12x64xf32>, vector<8x64xf32> -> vector<8x64xf32>
    %c0_7 = arith.constant 0 : index
    %c0_8 = arith.constant 0 : index
    %6 = vector.load %arg2[%c0_7, %c0_8] : memref<8x4xf32, #tpu.memory_space<vmem>>, vector<8x4xf32>
    %c0_9 = arith.constant 0 : index
    %c0_10 = arith.constant 0 : index
    %7 = vector.load %arg4[%c0_9, %c0_10] : memref<4x64xf32, #tpu.memory_space<vmem>>, vector<4x64xf32>
    %cst_11 = arith.constant dense<0.000000e+00> : vector<8x64xf32>
    %8 = tpu.matmul %6, %7, %cst_11 {dimension_numbers = #tpu.dot_dimension_numbers<[1], [0], [0], [1], [0, 0, 1, 1], [], []>} : vector<8x4xf32>, vector<4x64xf32>, vector<8x64xf32> -> vector<8x64xf32>
    %9 = arith.addf %5, %8 : vector<8x64xf32>
    %10 = vector.broadcast %0 : vector<1x64xf32> to vector<8x64xf32>
    %11 = arith.addf %9, %10 : vector<8x64xf32>
    %cst_12 = arith.constant 0.000000e+00 : f32
    %12 = vector.broadcast %cst_12 : f32 to vector<8x64xf32>
    %13 = arith.maximumf %11, %12 : vector<8x64xf32>
    %c0_13 = arith.constant 0 : index
    %c0_14 = arith.constant 0 : index
    %14 = vector.load %arg5[%c0_13, %c0_14] : memref<64x32xf32, #tpu.memory_space<vmem>>, vector<64x32xf32>
    %cst_15 = arith.constant dense<0.000000e+00> : vector<8x32xf32>
    %15 = tpu.matmul %13, %14, %cst_15 {dimension_numbers = #tpu.dot_dimension_numbers<[1], [0], [0], [1], [0, 0, 1, 1], [], []>} : vector<8x64xf32>, vector<64x32xf32>, vector<8x32xf32> -> vector<8x32xf32>
    %16 = vector.broadcast %1 : vector<1x32xf32> to vector<8x32xf32>
    %17 = arith.addf %15, %16 : vector<8x32xf32>
    %cst_16 = arith.constant 0.000000e+00 : f32
    %18 = vector.broadcast %cst_16 : f32 to vector<8x32xf32>
    %19 = arith.maximumf %17, %18 : vector<8x32xf32>
    %cst_17 = arith.constant dense<0.000000e+00> : vector<1x8xf32>
    %20 = tpu.matmul %2, %19, %cst_17 {dimension_numbers = #tpu.dot_dimension_numbers<[1], [1], [0], [0], [0, 0, 1, 0], [], []>} : vector<1x32xf32>, vector<8x32xf32>, vector<1x8xf32> -> vector<1x8xf32>
    %c0_18 = arith.constant 0 : index
    %21 = memref.load %arg7[%c0_18] : memref<1xf32, #tpu.memory_space<smem>>
    %22 = vector.broadcast %21 : f32 to vector<1x8xf32>
    %23 = arith.addf %20, %22 : vector<1x8xf32>
    %c0_19 = arith.constant 0 : index
    %c0_20 = arith.constant 0 : index
    %c0_21 = arith.constant 0 : index
    %24 = vector.load %arg8[%c0_19, %c0_20, %c0_21] : memref<1x1x8xf32, #tpu.memory_space<vmem>>, vector<1x1x8xf32>
    %25 = vector.shape_cast %24 : vector<1x1x8xf32> to vector<1x8xf32>
    %26 = vector.shape_cast %23 : vector<1x8xf32> to vector<1x1x8xf32>
    tpu.vector_store %arg8[%c0_19, %c0_20, %c0_21], %26 {strides = array<i32>} : memref<1x1x8xf32, #tpu.memory_space<vmem>>, vector<1x1x8xf32>,
    return
  }
  func.func @transform_0(%arg0: i32) -> (i32, i32) {
    %c0_i32 = arith.constant 0 : i32
    %c0_i32_0 = arith.constant 0 : i32
    return %arg0, %c0_i32 : i32, i32
  }
  func.func @transform_1(%arg0: i32) -> (i32, i32) {
    %c0_i32 = arith.constant 0 : i32
    %c0_i32_0 = arith.constant 0 : i32
    return %arg0, %c0_i32 : i32, i32
  }
  func.func @transform_2(%arg0: i32) -> (i32, i32) {
    %c0_i32 = arith.constant 0 : i32
    %c0_i32_0 = arith.constant 0 : i32
    %c0_i32_1 = arith.constant 0 : i32
    return %c0_i32, %c0_i32_0 : i32, i32
  }
  func.func @transform_3(%arg0: i32) -> (i32, i32) {
    %c0_i32 = arith.constant 0 : i32
    %c0_i32_0 = arith.constant 0 : i32
    %c0_i32_1 = arith.constant 0 : i32
    return %c0_i32, %c0_i32_0 : i32, i32
  }
  func.func @transform_4(%arg0: i32) -> (i32, i32) {
    %c0_i32 = arith.constant 0 : i32
    %c0_i32_0 = arith.constant 0 : i32
    %c0_i32_1 = arith.constant 0 : i32
    return %c0_i32, %c0_i32_0 : i32, i32
  }
  func.func @transform_5(%arg0: i32) -> (i32, i32) {
    %c0_i32 = arith.constant 0 : i32
    %c0_i32_0 = arith.constant 0 : i32
    %c0_i32_1 = arith.constant 0 : i32
    return %c0_i32, %c0_i32_0 : i32, i32
  }
  func.func @transform_6(%arg0: i32) -> i32 {
    %c0_i32 = arith.constant 0 : i32
    %c0_i32_0 = arith.constant 0 : i32
    return %c0_i32 : i32
  }
  func.func @transform_7(%arg0: i32) -> (i32, i32, i32) {
    %c0_i32 = arith.constant 0 : i32
    %c0_i32_0 = arith.constant 0 : i32
    %c0_i32_1 = arith.constant 0 : i32
    return %arg0, %c0_i32, %c0_i32_0 : i32, i32, i32
  }
}

</mosaic_0001>

<llo_original>
// kernel: critic_forward.1
$region0: #{critic_forward.1}
  #allocation0 [shape = 'u32[]', space=smem, size = 0x4, offset = 0x4, fixed_abs, tag = 'smem constant byte address 0x4 - core index']
  #allocation1 [shape = 'u32[144,128]{1,0:T(1,128)}', space=vmem, size = 0x12000, scoped, tag = 'internal scratch']
  #allocation2 [shape = 'f32[1]{0:T(128)S(6)}', space=smem, size = 0x200, scoped, tag = 'scoped memory for critic_forward.1']
  %s0 = inlined_call_operand.vmem [shape: f32[8,12], index: 0, kind: input, shape index: {}]
  %s1 = inlined_call_operand.vmem [shape: f32[8,4], index: 1, kind: input, shape index: {}]
  %s2 = inlined_call_operand.vmem [shape: f32[12,64], index: 2, kind: input, shape index: {}]
  %s3 = inlined_call_operand.vmem [shape: f32[4,64], index: 3, kind: input, shape index: {}]
  %s4 = inlined_call_operand.vmem [shape: f32[64,32], index: 4, kind: input, shape index: {}]
  %s5 = inlined_call_operand.vmem [shape: f32[1,128], index: 5, kind: input, shape index: {}]
  %s6 = inlined_call_operand.<no memory space> [shape: f32[1], index: 6, kind: input, shape index: {}]
  %s7 = inlined_call_operand.hbm [shape: f32[1,1,8], index: 7, kind: output, shape index: {}]
  %s8 = sld [smem:[#allocation0]]
  $region38: #{critic_forward.1} parent=0
    _
  %s10 = ssub.s32 1, %s8
  %s11 = scalar_select 0, %s10, %s8
  %12 = sst [smem:[#allocation2]] %s6
  $region1: #{critic_forward.1} parent=0
    #allocation3 [shape = 'u8[512]{0}', space=vmem, size = 0x400, scoped, tag = 'output window, operand 0, single buffered']
    #allocation4 [shape = 's32[1]{0}', space=sflag, size = 0x4, scoped, tag = 'scoped memory for critic_forward.1']
    %13 = vsyncpa [#allocation4], 0
    // Predicated region
    $region2: #{critic_forward.1} parent=1 // pred_check
      _
    $region3: #{critic_forward.1} parent=1 // pred_check_branch
      %15 = sbr.rel (0) target = $region5
    $region4: #{critic_forward.1} parent=1 // pred_region
      _
    $region5: #{critic_forward.1} parent=1 // pred_fallthru
      _
    // Predicated region
    $region6: #{critic_forward.1} parent=1 // pred_check
      _
    $region7: #{critic_forward.1} parent=1 // pred_check_branch
      %17 = sbr.rel (0) target = $region9
    $region8: #{critic_forward.1} parent=1 // pred_region
      _
    $region9: #{critic_forward.1} parent=1 // pred_fallthru
      _
    // Predicated region
    $region10: #{critic_forward.1} parent=1 // pred_check
      _
    $region11: #{critic_forward.1} parent=1 // pred_check_branch
      %19 = sbr.rel (0) target = $region13
    $region12: #{critic_forward.1} parent=1 // pred_region
      _
    $region13: #{critic_forward.1} parent=1 // pred_fallthru
      _
    // Predicated region
    $region14: #{critic_forward.1} parent=1 // pred_check
      _
    $region15: #{critic_forward.1} parent=1 // pred_check_branch
      %21 = sbr.rel (0) target = $region17
    $region16: #{critic_forward.1} parent=1 // pred_region
      _
    $region17: #{critic_forward.1} parent=1 // pred_fallthru
      _
    // Predicated region
    $region18: #{critic_forward.1} parent=1 // pred_check
      _
    $region19: #{critic_forward.1} parent=1 // pred_check_branch
      %23 = sbr.rel (0) target = $region21
    $region20: #{critic_forward.1} parent=1 // pred_region
      _
    $region21: #{critic_forward.1} parent=1 // pred_fallthru
      _
    // Predicated region
    $region22: #{critic_forward.1} parent=1 // pred_check
      _
    $region23: #{critic_forward.1} parent=1 // pred_check_branch
      %25 = sbr.rel (0) target = $region25
    $region24: #{critic_forward.1} parent=1 // pred_region
      _
    $region25: #{critic_forward.1} parent=1 // pred_fallthru
      _
    // Predicated region
    $region26: #{critic_forward.1} parent=1 // pred_check
      _
    $region27: #{critic_forward.1} parent=1 // pred_check_branch
      %27 = sbr.rel (0) target = $region29
    $region28: #{critic_forward.1} parent=1 // pred_region
      _
    $region29: #{critic_forward.1} parent=1 // pred_fallthru
      _
    %v28 = vld [vmem:[%s5] sm:$0x1]
    %v29 = vld [vmem:[%s0] sm:$0xff]
    %v30 = vld [vmem:[%s2] sm:$0xff]
    %v31 = vld [vmem:[%s2 + $0x8] sm:$0xf]
    %v32 = vld [vmem:[%s1] sm:$0xff]
    %v33 = vld [vmem:[%s3] sm:$0xf]
    %vm34 = vcmask 31744
    %v36 = vsel %vm34, %v32, 0
    %vm38 = vcmask 1043456
    %v40 = vsel %vm38, %v33, 0
    %42 = vmatprep.subr.mxu0 0.0
    %43 = vmatpush1.msra.mxu0 0.0
    %44 = vmatprep.subr.mxu0 0.0
    %45 = vmatpush1.msra.mxu0 0.0
    %46 = vmatprep.subr.mxu0 0.0
    %47 = vmatpush1.msra.mxu0 0.0
    %48 = vmatprep.subr.mxu0 0.0
    %49 = vmatpush1.msra.mxu0 0.0
    %50 = vmatprep.subr.mxu0 0.0
    %51 = vmatpush1.msra.mxu0 0.0
    %52 = vmatprep.subr.mxu0 0.0
    %53 = vmatpush1.msra.mxu0 0.0
    %54 = vmatprep.subr.mxu0 0.0
    %55 = vmatpush1.msra.mxu0 0.0
    %56 = vmatprep.subr.mxu0 0.0
    %57 = vmatpush1.msra.mxu0 0.0
    %58 = vmatprep.subr.mxu0 0.0
    %59 = vmatpush1.msra.mxu0 0.0
    %60 = vmatprep.subr.mxu0 0.0
    %61 = vmatpush1.msra.mxu0 0.0
    %62 = vmatprep.subr.mxu0 0.0
    %63 = vmatpush1.msra.mxu0 0.0
    %64 = vmatprep.subr.mxu0 0.0
    %65 = vmatpush1.msra.mxu0 0.0
    %66 = vmatprep.subr.mxu0 0.0
    %67 = vmatpush1.msra.mxu0 0.0
    %68 = vmatprep.subr.mxu0 0.0
    %69 = vmatpush1.msra.mxu0 0.0
    %70 = vmatprep.subr.mxu0 0.0
    %71 = vmatpush1.msra.mxu0 0.0
    %72 = vmatprep.subr.mxu0 0.0
    %73 = vmatpush1.msra.mxu0 %v40
    %74 = vmatprep.subr.mxu0 0.0
    %75 = vmatpush2.msra.mxu0 0.0
    %76 = vmatprep.subr.mxu0 0.0
    %77 = vmatpush2.msra.mxu0 0.0
    %78 = vmatprep.subr.mxu0 0.0
    %79 = vmatpush2.msra.mxu0 0.0
    %80 = vmatprep.subr.mxu0 0.0
    %81 = vmatpush2.msra.mxu0 0.0
    %82 = vmatprep.subr.mxu0 0.0
    %83 = vmatpush2.msra.mxu0 0.0
    %84 = vmatprep.subr.mxu0 0.0
    %85 = vmatpush2.msra.mxu0 0.0
    %86 = vmatprep.subr.mxu0 0.0
    %87 = vmatpush2.msra.mxu0 0.0
    %88 = vmatprep.subr.mxu0 0.0
    %89 = vmatpush2.msra.mxu0 0.0
    %90 = vmatprep.subr.mxu0 0.0
    %91 = vmatpush2.msra.mxu0 0.0
    %92 = vmatprep.subr.mxu0 0.0
    %93 = vmatpush2.msra.mxu0 0.0
    %94 = vmatprep.subr.mxu0 0.0
    %95 = vmatpush2.msra.mxu0 0.0
    %96 = vmatprep.subr.mxu0 0.0
    %97 = vmatpush2.msra.mxu0 0.0
    %98 = vmatprep.subr.mxu0 0.0
    %99 = vmatpush2.msra.mxu0 0.0
    %100 = vmatprep.subr.mxu0 0.0
    %101 = vmatpush2.msra.mxu0 0.0
    %102 = vmatprep.subr.mxu0 0.0
    %103 = vmatpush2.msra.mxu0 0.0
    %104 = vmatprep.subr.mxu0 0.0
    %105 = vmatpush2.msra.mxu0 0.0
    %106 = vmatprep.mubr.f32.mxu0 0.0
    %107 = vmatmul.mubr.f32.gmra.mxu0 %v36
    %v108 = vpop.f32.mrf.mxu0
    %v109 = vadd.f32 0.0, %v108
    %v110 = vpop.f32.mrf.mxu0
    %111 = vdwg.mxu0
    %vm112 = vcmask 97280
    %v114 = vsel %vm112, %v29, 0
    %v117 = vsel %vm38, %v31, 0
    %119 = vmatprep.subr.mxu0 0.0
    %120 = vmatpush1.msra.mxu0 0.0
    %121 = vmatprep.subr.mxu0 0.0
    %122 = vmatpush1.msra.mxu0 0.0
    %123 = vmatprep.subr.mxu0 0.0
    %124 = vmatpush1.msra.mxu0 0.0
    %125 = vmatprep.subr.mxu0 0.0
    %126 = vmatpush1.msra.mxu0 0.0
    %127 = vmatprep.subr.mxu0 0.0
    %128 = vmatpush1.msra.mxu0 0.0
    %129 = vmatprep.subr.mxu0 0.0
    %130 = vmatpush1.msra.mxu0 0.0
    %131 = vmatprep.subr.mxu0 0.0
    %132 = vmatpush1.msra.mxu0 0.0
    %133 = vmatprep.subr.mxu0 0.0
    %134 = vmatpush1.msra.mxu0 0.0
    %135 = vmatprep.subr.mxu0 0.0
    %136 = vmatpush1.msra.mxu0 0.0
    %137 = vmatprep.subr.mxu0 0.0
    %138 = vmatpush1.msra.mxu0 0.0
    %139 = vmatprep.subr.mxu0 0.0
    %140 = vmatpush1.msra.mxu0 0.0
    %141 = vmatprep.subr.mxu0 0.0
    %142 = vmatpush1.msra.mxu0 0.0
    %143 = vmatprep.subr.mxu0 0.0
    %144 = vmatpush1.msra.mxu0 0.0
    %145 = vmatprep.subr.mxu0 0.0
    %146 = vmatpush1.msra.mxu0 0.0
    %147 = vmatprep.subr.mxu0 0.0
    %148 = vmatpush1.msra.mxu0 %v117
    %149 = vmatprep.subr.mxu0 0.0
    %150 = vmatpush1.msra.mxu0 %v30
    %151 = vmatprep.subr.mxu0 0.0
    %152 = vmatpush2.msra.mxu0 0.0
    %153 = vmatprep.subr.mxu0 0.0
    %154 = vmatpush2.msra.mxu0 0.0
    %155 = vmatprep.subr.mxu0 0.0
    %156 = vmatpush2.msra.mxu0 0.0
    %157 = vmatprep.subr.mxu0 0.0
    %158 = vmatpush2.msra.mxu0 0.0
    %159 = vmatprep.subr.mxu0 0.0
    %160 = vmatpush2.msra.mxu0 0.0
    %161 = vmatprep.subr.mxu0 0.0
    %162 = vmatpush2.msra.mxu0 0.0
    %163 = vmatprep.subr.mxu0 0.0
    %164 = vmatpush2.msra.mxu0 0.0
    %165 = vmatprep.subr.mxu0 0.0
    %166 = vmatpush2.msra.mxu0 0.0
    %167 = vmatprep.subr.mxu0 0.0
    %168 = vmatpush2.msra.mxu0 0.0
    %169 = vmatprep.subr.mxu0 0.0
    %170 = vmatpush2.msra.mxu0 0.0
    %171 = vmatprep.subr.mxu0 0.0
    %172 = vmatpush2.msra.mxu0 0.0
    %173 = vmatprep.subr.mxu0 0.0
    %174 = vmatpush2.msra.mxu0 0.0
    %175 = vmatprep.subr.mxu0 0.0
    %176 = vmatpush2.msra.mxu0 0.0
    %177 = vmatprep.subr.mxu0 0.0
    %178 = vmatpush2.msra.mxu0 0.0
    %179 = vmatprep.subr.mxu0 0.0
    %180 = vmatpush2.msra.mxu0 0.0
    %181 = vmatprep.subr.mxu0 0.0
    %182 = vmatpush2.msra.mxu0 0.0
    %183 = vmatprep.mubr.f32.mxu0 0.0
    %184 = vmatmul.mubr.f32.gmra.mxu0 %v114
    %v185 = vpop.f32.mrf.mxu0
    %v186 = vadd.f32 %v109, %v185
    %v187 = vpop.f32.mrf.mxu0
    %188 = vdwg.mxu0
    %v190 = vlaneseq
    %v191 = vshrl.u32 %v190, 7
    %v192 = vsub.s32 0, %v191
    %v193 = vrot.slane %v28, %v192
    %v195 = vadd.f32 %v186, %v193
    %v196 = vmax.f32 %v195, 0.0
    %v197 = vld [vmem:[%s4] sm:$0xff]
    %v198 = vld [vmem:[%s4 + $0x8] sm:$0xff]
    %v199 = vld [vmem:[%s4 + $0x10] sm:$0xff]
    %v200 = vld [vmem:[%s4 + $0x18] sm:$0xff]
    %v201 = vld [vmem:[%s4 + $0x20] sm:$0xff]
    %v202 = vld [vmem:[%s4 + $0x28] sm:$0xff]
    %v203 = vld [vmem:[%s4 + $0x30] sm:$0xff]
    %v204 = vld [vmem:[%s4 + $0x38] sm:$0xff]
    %205 = vrot.lane.b32.xlu0 %v193, 64
    %v206 = vpop.permute.xlu0 %205
    %vm208 = vcmask 523264
    %v210 = vsel %vm208, %v196, 0
    %212 = vmatprep.subr.mxu0 0.0
    %213 = vmatpush1.msra.mxu0 0.0
    %214 = vmatprep.subr.mxu0 0.0
    %215 = vmatpush1.msra.mxu0 0.0
    %216 = vmatprep.subr.mxu0 0.0
    %217 = vmatpush1.msra.mxu0 0.0
    %218 = vmatprep.subr.mxu0 0.0
    %219 = vmatpush1.msra.mxu0 0.0
    %220 = vmatprep.subr.mxu0 0.0
    %221 = vmatpush1.msra.mxu0 0.0
    %222 = vmatprep.subr.mxu0 0.0
    %223 = vmatpush1.msra.mxu0 0.0
    %224 = vmatprep.subr.mxu0 0.0
    %225 = vmatpush1.msra.mxu0 0.0
    %226 = vmatprep.subr.mxu0 0.0
    %227 = vmatpush1.msra.mxu0 0.0
    %228 = vmatprep.subr.mxu0 0.0
    %229 = vmatpush1.msra.mxu0 %v204
    %230 = vmatprep.subr.mxu0 0.0
    %231 = vmatpush1.msra.mxu0 %v203
    %232 = vmatprep.subr.mxu0 0.0
    %233 = vmatpush1.msra.mxu0 %v202
    %234 = vmatprep.subr.mxu0 0.0
    %235 = vmatpush1.msra.mxu0 %v201
    %236 = vmatprep.subr.mxu0 0.0
    %237 = vmatpush1.msra.mxu0 %v200
    %238 = vmatprep.subr.mxu0 0.0
    %239 = vmatpush1.msra.mxu0 %v199
    %240 = vmatprep.subr.mxu0 0.0
    %241 = vmatpush1.msra.mxu0 %v198
    %242 = vmatprep.subr.mxu0 0.0
    %243 = vmatpush1.msra.mxu0 %v197
    %244 = vmatprep.subr.mxu0 0.0
    %245 = vmatpush2.msra.mxu0 0.0
    %246 = vmatprep.subr.mxu0 0.0
    %247 = vmatpush2.msra.mxu0 0.0
    %248 = vmatprep.subr.mxu0 0.0
    %249 = vmatpush2.msra.mxu0 0.0
    %250 = vmatprep.subr.mxu0 0.0
    %251 = vmatpush2.msra.mxu0 0.0
    %252 = vmatprep.subr.mxu0 0.0
    %253 = vmatpush2.msra.mxu0 0.0
    %254 = vmatprep.subr.mxu0 0.0
    %255 = vmatpush2.msra.mxu0 0.0
    %256 = vmatprep.subr.mxu0 0.0
    %257 = vmatpush2.msra.mxu0 0.0
    %258 = vmatprep.subr.mxu0 0.0
    %259 = vmatpush2.msra.mxu0 0.0
    %260 = vmatprep.subr.mxu0 0.0
    %261 = vmatpush2.msra.mxu0 0.0
    %262 = vmatprep.subr.mxu0 0.0
    %263 = vmatpush2.msra.mxu0 0.0
    %264 = vmatprep.subr.mxu0 0.0
    %265 = vmatpush2.msra.mxu0 0.0
    %266 = vmatprep.subr.mxu0 0.0
    %267 = vmatpush2.msra.mxu0 0.0
    %268 = vmatprep.subr.mxu0 0.0
    %269 = vmatpush2.msra.mxu0 0.0
    %270 = vmatprep.subr.mxu0 0.0
    %271 = vmatpush2.msra.mxu0 0.0
    %272 = vmatprep.subr.mxu0 0.0
    %273 = vmatpush2.msra.mxu0 0.0
    %274 = vmatprep.subr.mxu0 0.0
    %275 = vmatpush2.msra.mxu0 0.0
    %276 = vmatprep.mubr.f32.mxu0 0.0
    %277 = vmatmul.mubr.f32.gmra.mxu0 %v210
    %v278 = vpop.f32.mrf.mxu0
    %v279 = vadd.f32 %v206, %v278
    %v280 = vpop.f32.mrf.mxu0
    %281 = vdwg.mxu0
    %v282 = vmax.f32 %v279, 0.0
    %s283 = sld [smem:[#allocation2]]
    %v284 = vstv %s283
    %285 = vrot.lane.b32.xlu0 %v193, 32
    %v286 = vpop.permute.xlu0 %285
    %vm287 = vcmask 261120
    %v288 = vsel %vm287, %v286, 0
    %v291 = vsel %vm287, %v282, 0
    %293 = vmatprep.subr.mxu0 0.0
    %294 = vmatpush1.xpose.msra.mxu0 0.0
    %295 = vmatprep.subr.mxu0 0.0
    %296 = vmatpush1.xpose.msra.mxu0 0.0
    %297 = vmatprep.subr.mxu0 0.0
    %298 = vmatpush1.xpose.msra.mxu0 0.0
    %299 = vmatprep.subr.mxu0 0.0
    %300 = vmatpush1.xpose.msra.mxu0 0.0
    %301 = vmatprep.subr.mxu0 0.0
    %302 = vmatpush1.xpose.msra.mxu0 0.0
    %303 = vmatprep.subr.mxu0 0.0
    %304 = vmatpush1.xpose.msra.mxu0 0.0
    %305 = vmatprep.subr.mxu0 0.0
    %306 = vmatpush1.xpose.msra.mxu0 0.0
    %307 = vmatprep.subr.mxu0 0.0
    %308 = vmatpush1.xpose.msra.mxu0 0.0
    %309 = vmatprep.subr.mxu0 0.0
    %310 = vmatpush1.xpose.msra.mxu0 0.0
    %311 = vmatprep.subr.mxu0 0.0
    %312 = vmatpush1.xpose.msra.mxu0 0.0
    %313 = vmatprep.subr.mxu0 0.0
    %314 = vmatpush1.xpose.msra.mxu0 0.0
    %315 = vmatprep.subr.mxu0 0.0
    %316 = vmatpush1.xpose.msra.mxu0 0.0
    %317 = vmatprep.subr.mxu0 0.0
    %318 = vmatpush1.xpose.msra.mxu0 0.0
    %319 = vmatprep.subr.mxu0 0.0
    %320 = vmatpush1.xpose.msra.mxu0 0.0
    %321 = vmatprep.subr.mxu0 0.0
    %322 = vmatpush1.xpose.msra.mxu0 0.0
    %323 = vmatprep.subr.mxu0 0.0
    %324 = vmatpush1.xpose.msra.mxu0 %v291
    %325 = vmatprep.subr.mxu0 0.0
    %326 = vmatpush2.xpose.msra.mxu0 0.0
    %327 = vmatprep.subr.mxu0 0.0
    %328 = vmatpush2.xpose.msra.mxu0 0.0
    %329 = vmatprep.subr.mxu0 0.0
    %330 = vmatpush2.xpose.msra.mxu0 0.0
    %331 = vmatprep.subr.mxu0 0.0
    %332 = vmatpush2.xpose.msra.mxu0 0.0
    %333 = vmatprep.subr.mxu0 0.0
    %334 = vmatpush2.xpose.msra.mxu0 0.0
    %335 = vmatprep.subr.mxu0 0.0
    %336 = vmatpush2.xpose.msra.mxu0 0.0
    %337 = vmatprep.subr.mxu0 0.0
    %338 = vmatpush2.xpose.msra.mxu0 0.0
    %339 = vmatprep.subr.mxu0 0.0
    %340 = vmatpush2.xpose.msra.mxu0 0.0
    %341 = vmatprep.subr.mxu0 0.0
    %342 = vmatpush2.xpose.msra.mxu0 0.0
    %343 = vmatprep.subr.mxu0 0.0
    %344 = vmatpush2.xpose.msra.mxu0 0.0
    %345 = vmatprep.subr.mxu0 0.0
    %346 = vmatpush2.xpose.msra.mxu0 0.0
    %347 = vmatprep.subr.mxu0 0.0
    %348 = vmatpush2.xpose.msra.mxu0 0.0
    %349 = vmatprep.subr.mxu0 0.0
    %350 = vmatpush2.xpose.msra.mxu0 0.0
    %351 = vmatprep.subr.mxu0 0.0
    %352 = vmatpush2.xpose.msra.mxu0 0.0
    %353 = vmatprep.subr.mxu0 0.0
    %354 = vmatpush2.xpose.msra.mxu0 0.0
    %355 = vmatprep.subr.mxu0 0.0
    %356 = vmatpush2.xpose.msra.mxu0 0.0
    %357 = vmatprep.mubr.f32.mxu0 0.0
    %358 = vmatmul.mubr.f32.gmra.mxu0 %v288
    %v359 = vpop.f32.mrf.mxu0
    %v360 = vadd.f32 %v284, %v359
    %v361 = vpop.f32.mrf.mxu0
    %362 = vdwg.mxu0
    %vm363 = vcmask 57344
    %364 = vst.msk [vmem:[#allocation3] sm:$0x1] %vm363, %v360
    // Predicated region
    $region30: #{critic_forward.1} parent=1 // pred_check
      _
    $region31: #{critic_forward.1} parent=1 // pred_check_branch
      %366 = sbr.rel (0) target = $region33
    $region32: #{critic_forward.1} parent=1 // pred_region
      %s368 = ssub.s32 16, 16
      %369 = vsyncadd [#allocation4], %s368
      %s371 = sshll.u32 [#allocation3], 4
      %s372 = int_to_ptr.vmem [resolvable:$true] %s371
      %374 = dma.vmem_to_hbm [thread:$0]  %s372, 16, %s7, [#allocation4]
    $region33: #{critic_forward.1} parent=1 // pred_fallthru
      _
    // Predicated region
    $region34: #{critic_forward.1} parent=1 // pred_check
      _
    $region35: #{critic_forward.1} parent=1 // pred_check_branch
      %376 = sbr.rel (0) target = $region37
    $region36: #{critic_forward.1} parent=1 // pred_region
      %377 = dma.done [#allocation4], 16
    $region37: #{critic_forward.1} parent=1 // pred_fallthru
      _
    %378 = vsyncpa [#allocation4], 1

</llo_original>
